<compile_context>
chip_gen: v6e
topology: v6e:2x2x1
jax: 0.10.0
libtpu: 0.0.40
codegen_flags: <defaults>
</compile_context>

<pallas_src>
import math

import jax
import jax.numpy as jnp
from jax.experimental import pallas as pl
from jax.experimental.pallas import tpu as pltpu


# ----------------------------- helpers -----------------------------

def _pick_tile(n, cap, align):
    """Largest t <= cap with t % align == 0 and n % t == 0; fall back to full n."""
    if n <= cap:
        return n
    t = (cap // align) * align
    while t >= align:
        if n % t == 0:
            return t
        t -= align
    return n


def _rep(shape):
    """BlockSpec for an array that is fully resident (same block every grid step)."""
    rank = len(shape)
    return pl.BlockSpec(shape, lambda *_: (0,) * rank)


def _layer_norm_f32(x, gamma, beta, eps):
    mean = jnp.mean(x, axis=-1, keepdims=True)
    var = jnp.mean(jnp.square(x - mean), axis=-1, keepdims=True)
    return (x - mean) * jax.lax.rsqrt(var + eps) * gamma + beta


def _vmem_capacity_bytes():
    """Physical VMEM of the current chip; conservative (v7x) fallback."""
    try:
        info = pltpu.get_tpu_info()
        for name in ("vmem_capacity_bytes", "vmem_size_bytes", "vmem_bytes"):
            v = getattr(info, name, None)
            if v:
                return int(v)
    except Exception:
        pass
    return 64 * 1024 * 1024


# ----------------------------- stage 1: LN + fused QKV -----------------------------

def _make_qkv_kernel(num_heads, hidden, eps):
    def kernel(x_ref, gamma_ref, beta_ref, w_ref, b_ref, q_ref, k_ref, v_ref):
        x = x_ref[0].astype(jnp.float32)                      # [ts, H]
        ts = x.shape[0]
        dh = hidden // num_heads
        x_ln = _layer_norm_f32(x, gamma_ref[0], beta_ref[0], eps)
        xc = x_ln.astype(w_ref.dtype)                         # bf16/f32 MXU operand
        # One fused [ts,H] x [H,3H] MXU matmul (Q scale folded into the weight).
        y = jnp.dot(xc, w_ref[...], preferred_element_type=jnp.float32) + b_ref[0]

        def emit(col, o_ref):
            t = y[:, col * hidden:(col + 1) * hidden].reshape(ts, num_heads, dh)
            o_ref[0] = pltpu.einshape("shd->hsd", t).astype(o_ref.dtype)

        emit(0, q_ref)
        emit(1, k_ref)
        emit(2, v_ref)

    return kernel


# ----------------------------- stage 2a: flash attention (no probs) ---------------

def _make_flash_kernel(num_heads, head_dim, tk, has_mask, kv_resident):
    def kernel(*refs):
        if has_mask:
            (q_ref, k_ref, v_ref, mask_ref, x_ref, w_out_ref, b_out_ref,
             o_ref, m_sc, l_sc, acc_sc) = refs
        else:
            (q_ref, k_ref, v_ref, x_ref, w_out_ref, b_out_ref,
             o_ref, m_sc, l_sc, acc_sc) = refs
            mask_ref = None

        ki = pl.program_id(2)

        @pl.when(ki == 0)
        def _():
            m_sc[...] = jnp.full_like(m_sc, -jnp.inf)
            l_sc[...] = jnp.zeros_like(l_sc)
            acc_sc[...] = jnp.zeros_like(acc_sc)

        q = q_ref[0]                                          # [nh, tq, dh]
        if kv_resident:
            # K/V live in VMEM for the whole batch; slice the current kv chunk.
            off = pl.multiple_of(ki * tk, tk)
            k = k_ref[0, :, pl.ds(off, tk), :]                # [nh, tk, dh]
            v = v_ref[0, :, pl.ds(off, tk), :]
        else:
            k = k_ref[0]                                      # [nh, tk, dh]
            v = v_ref[0]

        # Head-batched Q @ K^T: contract last dims, batch over heads (batch dim 0).
        s = jax.lax.dot_general(q, k, (((2,), (2,)), ((0,), (0,))),
                                preferred_element_type=jnp.float32)       # [nh, tq, tk]
        if mask_ref is not None:
            s = s + mask_ref[0].astype(jnp.float32)[None, :, :]

        m_prev = m_sc[...]                                    # lane-replicated [nh,tq,128]
        m_new = jnp.maximum(m_prev, jnp.max(s, axis=-1, keepdims=True))
        alpha = jnp.exp(m_prev - m_new)                       # [nh, tq, 128]
        p = jnp.exp(s - m_new[:, :, :1])                      # [nh, tq, tk] f32
        l_sc[...] = alpha * l_sc[...] + jnp.sum(p, axis=-1, keepdims=True)
        pv = jax.lax.dot_general(p.astype(v.dtype), v, (((2,), (1,)), ((0,), (0,))),
                                 preferred_element_type=jnp.float32)      # [nh, tq, dh]
        acc_sc[...] = alpha[:, :, :1] * acc_sc[...] + pv
        m_sc[...] = m_new

        @pl.when(ki == pl.num_programs(2) - 1)
        def _():
            l_full = l_sc[...]
            inv_l = pl.reciprocal(l_full[:, :, :1], approx=False)   # exact: output path
            attn = acc_sc[...] * inv_l                              # [nh, tq, dh]
            attn = pltpu.einshape("hqd->qhd", attn)
            attn = attn.reshape(attn.shape[0], num_heads * head_dim)  # [tq, H]
            attn = attn.astype(w_out_ref.dtype)
            proj = jnp.dot(attn, w_out_ref[...],
                           preferred_element_type=jnp.float32) + b_out_ref[0]
            o_ref[0] = (proj + x_ref[0].astype(jnp.float32)).astype(o_ref.dtype)

    return kernel


# ----------------------------- stage 2b: attention with probs output --------------

def _make_probs_kernel(num_heads, head_dim, has_mask):
    def kernel(*refs):
        if has_mask:
            (q_ref, k_ref, v_ref, mask_ref, x_ref, w_out_ref, b_out_ref,
             o_ref, probs_ref) = refs
        else:
            (q_ref, k_ref, v_ref, x_ref, w_out_ref, b_out_ref,
             o_ref, probs_ref) = refs
            mask_ref = None

        q = q_ref[0]                                          # [nh, tq, dh]
        k = k_ref[0]                                          # [nh, S, dh]
        v = v_ref[0]                                          # [nh, S, dh]

        s = jax.lax.dot_general(q, k, (((2,), (2,)), ((0,), (0,))),
                                preferred_element_type=jnp.float32)       # [nh, tq, S]
        if mask_ref is not None:
            s = s + mask_ref[0].astype(jnp.float32)[None, :, :]

        m = jnp.max(s, axis=-1, keepdims=True)
        p = jnp.exp(s - m)
        l = jnp.sum(p, axis=-1, keepdims=True)
        p = p * pl.reciprocal(l, approx=False)                # exact: probs go to user
        probs_ref[0] = p.astype(probs_ref.dtype)              # lane-dense [nh, tq, S]

        pv = jax.lax.dot_general(p.astype(v.dtype), v, (((2,), (1,)), ((0,), (0,))),
                                 preferred_element_type=jnp.float32)      # [nh, tq, dh]
        attn = pltpu.einshape("hqd->qhd", pv)
        attn = attn.reshape(attn.shape[0], num_heads * head_dim)          # [tq, H]
        attn = attn.astype(w_out_ref.dtype)
        proj = jnp.dot(attn, w_out_ref[...],
                       preferred_element_type=jnp.float32) + b_out_ref[0]
        o_ref[0] = (proj + x_ref[0].astype(jnp.float32)).astype(o_ref.dtype)

    return kernel


# ----------------------------- wrapper -----------------------------

def lean_self_attention(hidden_states, params, num_heads, attention_mask=None,
                        output_attentions=False, eps=1e-12, use_bf16=True):
    """hidden_states: [B, S, H] f32.  attention_mask: [B, S, S] additive or None.
    Returns (out,) or (out, probs) mirroring the PyTorch module."""
    B, S, H = hidden_states.shape
    assert H % num_heads == 0
    dh = H // num_heads
    scale = 1.0 / math.sqrt(dh)
    has_mask = attention_mask is not None
    compute_dtype = jnp.bfloat16 if use_bf16 else jnp.float32   # bf16 MXU by default
    f32 = jnp.float32
    itemsize = jnp.dtype(compute_dtype).itemsize

    # ---- parameter prep (host-side): fold Q scale, fuse QKV weight, cast for MXU ----
    w_qkv = params["w_qkv"].astype(f32)                  # [H, 3H], [in, out] layout
    b_qkv = params["b_qkv"].astype(f32)
    w_qkv_fused = jnp.concatenate(
        [w_qkv[:, :H] * scale, w_qkv[:, H:]], axis=1).astype(compute_dtype)   # [H, 3H]
    b_qkv_fused = jnp.concatenate(
        [b_qkv[:H] * scale, b_qkv[H:]], axis=0).reshape(1, 3 * H)             # f32
    w_out = params["w_out"].astype(compute_dtype)        # [H, H]
    b_out = params["b_out"].astype(f32).reshape(1, H)
    gamma = params["ln_gamma"].astype(f32).reshape(1, H)
    beta = params["ln_beta"].astype(f32).reshape(1, H)
    mask = attention_mask.astype(compute_dtype) if has_mask else None

    # ---- chip-aware VMEM limit and tile caps (v5e/v6e: 128 MiB, v7x: 64 MiB) ----
    vmem_cap = _vmem_capacity_bytes()
    vmem_limit = min((vmem_cap * 3) // 4, 100 * 1024 * 1024)
    big_vmem = vmem_cap >= 96 * 1024 * 1024
    ts_cap = 1024 if big_vmem else 512
    tq_cap = 512 if big_vmem else 256
    tk_cap = 1024 if big_vmem else 512

    ts = _pick_tile(S, ts_cap, 8)                        # LN/QKV row tile
    tq = _pick_tile(S, tq_cap, 8)                        # query tile
    tk = _pick_tile(S, tk_cap, 128)                      # kv tile, lane-aligned
    if tk > tk_cap and not has_mask:
        # No 128-aligned divisor <= cap; without a mask an 8-aligned tile is fine.
        tk = _pick_tile(S, tk_cap, 8)
    nq, nk = S // tq, S // tk

    # Hold full K/V per batch in VMEM when it fits -> no nq-fold K/V HBM re-read.
    kv_resident = (4 * S * H * itemsize) <= (2 * vmem_limit) // 5

    # ---------------- Stage 1: LayerNorm + fused QKV projection ----------------
    qkv_spec_out = pl.BlockSpec((1, num_heads, ts, dh), lambda b, si: (b, 0, si, 0))
    qkv_cost = pl.CostEstimate(
        flops=int(2 * B * S * H * 3 * H + 10 * B * S * H),
        transcendentals=int(B * S),
        bytes_accessed=int(4 * B * S * H + 3 * itemsize * B * S * H
                           + 3 * itemsize * H * H + 8 * H))

    q, k, v = pl.pallas_call(
        _make_qkv_kernel(num_heads, H, eps),
        out_shape=tuple(jax.ShapeDtypeStruct((B, num_heads, S, dh), compute_dtype)
                        for _ in range(3)),
        grid_spec=pltpu.PrefetchScalarGridSpec(
            num_scalar_prefetch=0,
            grid=(B, S // ts),
            in_specs=[
                pl.BlockSpec((1, ts, H), lambda b, si: (b, si, 0)),   # x
                _rep((1, H)), _rep((1, H)),                            # gamma, beta
                _rep((H, 3 * H)), _rep((1, 3 * H)),                    # fused W, b
            ],
            out_specs=(qkv_spec_out, qkv_spec_out, qkv_spec_out)),
        compiler_params=pltpu.CompilerParams(
            dimension_semantics=("parallel", "parallel"),
            vmem_limit_bytes=vmem_limit),
        cost_estimate=qkv_cost,
    )(hidden_states, gamma, beta, w_qkv_fused, b_qkv_fused)

    # ---------------- Stage 2: attention + out-proj + residual ----------------
    if not output_attentions:
        if kv_resident:
            kv_spec = pl.BlockSpec((1, num_heads, S, dh), lambda b, qi, ki: (b, 0, 0, 0))
        else:
            kv_spec = pl.BlockSpec((1, num_heads, tk, dh), lambda b, qi, ki: (b, 0, ki, 0))
        in_specs = [
            pl.BlockSpec((1, num_heads, tq, dh), lambda b, qi, ki: (b, 0, qi, 0)),
            kv_spec, kv_spec,
        ]
        inputs = [q, k, v]
        if has_mask:
            in_specs.append(pl.BlockSpec((1, tq, tk), lambda b, qi, ki: (b, qi, ki)))
            inputs.append(mask)
        in_specs += [
            pl.BlockSpec((1, tq, H), lambda b, qi, ki: (b, qi, 0)),   # residual x
            _rep((H, H)), _rep((1, H)),                                # w_out, b_out
        ]
        inputs += [hidden_states, w_out, b_out]

        kv_reads = 1 if kv_resident else nq
        attn_cost = pl.CostEstimate(
            flops=int(4 * B * num_heads * S * S * dh + 2 * B * S * H * H
                      + 6 * B * num_heads * S * S),
            transcendentals=int(B * num_heads * S * S),
            bytes_accessed=int(itemsize * B * S * H * (1 + 2 * kv_reads)
                               + 8 * B * S * H + itemsize * H * H
                               + (itemsize * B * S * S if has_mask else 0)))

        out = pl.pallas_call(
            _make_flash_kernel(num_heads, dh, tk, has_mask, kv_resident),
            out_shape=jax.ShapeDtypeStruct((B, S, H), hidden_states.dtype),
            grid_spec=pltpu.PrefetchScalarGridSpec(
                num_scalar_prefetch=0,
                grid=(B, nq, nk),
                in_specs=in_specs,
                out_specs=pl.BlockSpec((1, tq, H), lambda b, qi, ki: (b, qi, 0)),
                scratch_shapes=[pltpu.VMEM((num_heads, tq, 128), jnp.float32),
                                pltpu.VMEM((num_heads, tq, 128), jnp.float32),
                                pltpu.VMEM((num_heads, tq, dh), jnp.float32)]),
            compiler_params=pltpu.CompilerParams(
                dimension_semantics=("parallel", "parallel", "arbitrary"),
                vmem_limit_bytes=vmem_limit),
            cost_estimate=attn_cost,
        )(*inputs)
        return (out,)

    # output_attentions=True: also emit [B, nh, S, S] probs (lane-dense blocks).
    # Cap tq so the f32 score block (nh * tq * S * 4) stays within the VMEM budget.
    tq_cap_p = max(8, ((vmem_limit // 4) // max(1, num_heads * S * 4)) // 8 * 8)
    tq_p = _pick_tile(S, min(tq_cap, tq_cap_p), 8)
    nq_p = S // tq_p

    in_specs = [
        pl.BlockSpec((1, num_heads, tq_p, dh), lambda b, qi: (b, 0, qi, 0)),
        pl.BlockSpec((1, num_heads, S, dh), lambda b, qi: (b, 0, 0, 0)),
        pl.BlockSpec((1, num_heads, S, dh), lambda b, qi: (b, 0, 0, 0)),
    ]
    inputs = [q, k, v]
    if has_mask:
        in_specs.append(pl.BlockSpec((1, tq_p, S), lambda b, qi: (b, qi, 0)))
        inputs.append(mask)
    in_specs += [
        pl.BlockSpec((1, tq_p, H), lambda b, qi: (b, qi, 0)),
        _rep((H, H)), _rep((1, H)),
    ]
    inputs += [hidden_states, w_out, b_out]

    probs_cost = pl.CostEstimate(
        flops=int(4 * B * num_heads * S * S * dh + 2 * B * S * H * H
                  + 6 * B * num_heads * S * S),
        transcendentals=int(B * num_heads * S * S),
        bytes_accessed=int(3 * itemsize * B * S * H + 8 * B * S * H
                           + 4 * B * num_heads * S * S + itemsize * H * H
                           + (itemsize * B * S * S if has_mask else 0)))

    out, probs = pl.pallas_call(
        _make_probs_kernel(num_heads, dh, has_mask),
        out_shape=(jax.ShapeDtypeStruct((B, S, H), hidden_states.dtype),
                   jax.ShapeDtypeStruct((B, num_heads, S, S), jnp.float32)),
        grid_spec=pltpu.PrefetchScalarGridSpec(
            num_scalar_prefetch=0,
            grid=(B, nq_p),
            in_specs=in_specs,
            out_specs=(pl.BlockSpec((1, tq_p, H), lambda b, qi: (b, qi, 0)),
                       pl.BlockSpec((1, num_heads, tq_p, S), lambda b, qi: (b, 0, qi, 0)))),
        compiler_params=pltpu.CompilerParams(
            dimension_semantics=("parallel", "parallel"),
            vmem_limit_bytes=vmem_limit),
        cost_estimate=probs_cost,
    )(*inputs)
    return (out, probs)


# ----------------------------- plain-JAX reference -----------------------------

def reference(hidden_states, params, num_heads, attention_mask=None, eps=1e-12):
    B, S, H = hidden_states.shape
    dh = H // num_heads
    x = hidden_states
    mean = jnp.mean(x, axis=-1, keepdims=True)
    var = jnp.mean((x - mean) ** 2, axis=-1, keepdims=True)
    x_ln = (x - mean) / jnp.sqrt(var + eps) * params["ln_gamma"] + params["ln_beta"]
    qkv = x_ln @ params["w_qkv"] + params["b_qkv"]
    qh, kh, vh = jnp.split(qkv, 3, axis=-1)

    def heads(t):
        return t.reshape(B, S, num_heads, dh).transpose(0, 2, 1, 3)

    qh, kh, vh = heads(qh), heads(kh), heads(vh)
    scores = jnp.einsum("bhqd,bhkd->bhqk", qh, kh) / math.sqrt(dh)
    if attention_mask is not None:
        scores = scores + attention_mask[:, None]
    probs = jax.nn.softmax(scores, axis=-1)
    attn = jnp.einsum("bhqk,bhkd->bhqd", probs, vh)
    attn = attn.transpose(0, 2, 1, 3).reshape(B, S, H)
    out = attn @ params["w_out"] + params["b_out"] + hidden_states
    return out, probs


# ----------------------------- demo / self-check -----------------------------

if __name__ == "__main__":
    B, S, H, NH = 2, 8, 32, 4

    key = jax.random.PRNGKey(0)
    k_x, k_wqkv, k_bqkv, k_wout, k_bout, k_mask = jax.random.split(key, 6)

    hidden_states = jax.random.normal(k_x, (B, S, H), dtype=jnp.float32)
    attention_mask = 0.5 * jax.random.normal(k_mask, (B, S, S), dtype=jnp.float32)

    params = {
        "w_qkv": 0.1 * jax.random.normal(k_wqkv, (H, 3 * H), dtype=jnp.float32),
        "b_qkv": 0.01 * jax.random.normal(k_bqkv, (3 * H,), dtype=jnp.float32),
        "w_out": 0.1 * jax.random.normal(k_wout, (H, H), dtype=jnp.float32),
        "b_out": 0.01 * jax.random.normal(k_bout, (H,), dtype=jnp.float32),
        "ln_gamma": jnp.ones((H,), dtype=jnp.float32),
        "ln_beta": jnp.zeros((H,), dtype=jnp.float32),
    }

    ref_nomask, _ = reference(hidden_states, params, NH, None)
    ref_mask, refp_mask = reference(hidden_states, params, NH, attention_mask)

    # Case 1: module defaults (mask=None, no probs) — flash path, bf16 MXU (default).
    (out1,) = lean_self_attention(hidden_states, params, NH)
    jax.block_until_ready(out1)
    assert jnp.allclose(out1, ref_nomask, rtol=5e-2, atol=5e-2), "bf16 flash (no-mask) mismatch"

    # Case 2: f32 path, no mask — tight parity for the flash kernel.
    (out2,) = lean_self_attention(hidden_states, params, NH, use_bf16=False)
    jax.block_until_ready(out2)
    assert jnp.allclose(out2, ref_nomask, rtol=1e-3, atol=1e-3), "f32 flash (no-mask) mismatch"

    # Case 3: additive mask + output_attentions=True — probs path, f32, tight parity.
    out3, probs3 = lean_self_attention(hidden_states, params, NH,
                                       attention_mask=attention_mask,
                                       output_attentions=True, use_bf16=False)
    jax.block_until_ready((out3, probs3))
    assert jnp.allclose(out3, ref_mask, rtol=1e-4, atol=1e-4), "probs path output mismatch"
    assert jnp.allclose(probs3, refp_mask, rtol=1e-4, atol=1e-4), "probs path probs mismatch"

    # Case 4: bf16 flash path with mask.
    (out4,) = lean_self_attention(hidden_states, params, NH, attention_mask=attention_mask)
    jax.block_until_ready(out4)
    assert jnp.allclose(out4, ref_mask, rtol=5e-2, atol=5e-2), "bf16 flash (mask) mismatch"

    print("KERNEL_OK")
</pallas_src>

<mosaic_0001>
module attributes {stable_mosaic.version = 11 : i64} {
  func.func @kernel(%arg0: i32, %arg1: i32, %arg2: memref<1x8x32xf32, #tpu.memory_space<vmem>>, %arg3: memref<1x32xf32, #tpu.memory_space<vmem>>, %arg4: memref<1x32xf32, #tpu.memory_space<vmem>>, %arg5: memref<32x96xbf16, #tpu.memory_space<vmem>>, %arg6: memref<1x96xf32, #tpu.memory_space<vmem>>, %arg7: memref<1x4x8x8xbf16, #tpu.memory_space<vmem>>, %arg8: memref<1x4x8x8xbf16, #tpu.memory_space<vmem>>, %arg9: memref<1x4x8x8xbf16, #tpu.memory_space<vmem>>) attributes {dimension_semantics = [#tpu.dimension_semantics<parallel>, #tpu.dimension_semantics<parallel>], iteration_bounds = array<i64: 2, 1>, scalar_prefetch = 0 : i64, scratch_operands = 0 : i64, tpu.core_type = #tpu.core_type<tc>, window_params = [{transform_indices = @transform_0, window_bounds = array<i64: 1, 8, 32>}, {pipeline_mode = #tpu.pipeline_mode<synchronous>, transform_indices = @transform_1, window_bounds = array<i64: 1, 32>}, {pipeline_mode = #tpu.pipeline_mode<synchronous>, transform_indices = @transform_2, window_bounds = array<i64: 1, 32>}, {pipeline_mode = #tpu.pipeline_mode<synchronous>, transform_indices = @transform_3, window_bounds = array<i64: 32, 96>}, {pipeline_mode = #tpu.pipeline_mode<synchronous>, transform_indices = @transform_4, window_bounds = array<i64: 1, 96>}, {transform_indices = @transform_5, window_bounds = array<i64: 1, 4, 8, 8>}, {transform_indices = @transform_6, window_bounds = array<i64: 1, 4, 8, 8>}, {transform_indices = @transform_7, window_bounds = array<i64: 1, 4, 8, 8>}]} {
    %c0 = arith.constant 0 : index
    %c0_0 = arith.constant 0 : index
    %c0_1 = arith.constant 0 : index
    %0 = vector.load %arg2[%c0, %c0_0, %c0_1] : memref<1x8x32xf32, #tpu.memory_space<vmem>>, vector<1x8x32xf32>
    %1 = vector.shape_cast %0 : vector<1x8x32xf32> to vector<8x32xf32>
    %c0_2 = arith.constant 0 : index
    %c0_3 = arith.constant 0 : index
    %2 = vector.load %arg3[%c0_2, %c0_3] : memref<1x32xf32, #tpu.memory_space<vmem>>, vector<1x32xf32>
    %3 = vector.shape_cast %2 : vector<1x32xf32> to vector<32xf32>
    %c0_4 = arith.constant 0 : index
    %c0_5 = arith.constant 0 : index
    %4 = vector.load %arg4[%c0_4, %c0_5] : memref<1x32xf32, #tpu.memory_space<vmem>>, vector<1x32xf32>
    %5 = vector.shape_cast %4 : vector<1x32xf32> to vector<32xf32>
    %cst = arith.constant dense<0.000000e+00> : vector<8xf32>
    %6 = vector.multi_reduction <add>, %1, %cst [1] : vector<8x32xf32> to vector<8xf32>
    %7 = vector.shape_cast %6 : vector<8xf32> to vector<8x1xf32>
    %cst_6 = arith.constant 3.200000e+01 : f32
    %8 = vector.broadcast %cst_6 : f32 to vector<8x1xf32>
    %9 = arith.divf %7, %8 : vector<8x1xf32>
    %10 = vector.broadcast %9 : vector<8x1xf32> to vector<8x32xf32>
    %11 = arith.subf %1, %10 : vector<8x32xf32>
    %12 = arith.mulf %11, %11 : vector<8x32xf32>
    %cst_7 = arith.constant dense<0.000000e+00> : vector<8xf32>
    %13 = vector.multi_reduction <add>, %12, %cst_7 [1] : vector<8x32xf32> to vector<8xf32>
    %14 = vector.shape_cast %13 : vector<8xf32> to vector<8x1xf32>
    %cst_8 = arith.constant 3.200000e+01 : f32
    %15 = vector.broadcast %cst_8 : f32 to vector<8x1xf32>
    %16 = arith.divf %14, %15 : vector<8x1xf32>
    %17 = vector.broadcast %9 : vector<8x1xf32> to vector<8x32xf32>
    %18 = arith.subf %1, %17 : vector<8x32xf32>
    %cst_9 = arith.constant 9.99999996E-13 : f32
    %19 = vector.broadcast %cst_9 : f32 to vector<8x1xf32>
    %20 = arith.addf %16, %19 : vector<8x1xf32>
    %21 = math.rsqrt %20 : vector<8x1xf32>
    %22 = vector.broadcast %21 : vector<8x1xf32> to vector<8x32xf32>
    %23 = arith.mulf %18, %22 : vector<8x32xf32>
    %24 = vector.shape_cast %3 : vector<32xf32> to vector<1x32xf32>
    %25 = vector.broadcast %24 : vector<1x32xf32> to vector<8x32xf32>
    %26 = arith.mulf %23, %25 : vector<8x32xf32>
    %27 = vector.shape_cast %5 : vector<32xf32> to vector<1x32xf32>
    %28 = vector.broadcast %27 : vector<1x32xf32> to vector<8x32xf32>
    %29 = arith.addf %26, %28 : vector<8x32xf32>
    %30 = arith.truncf %29 : vector<8x32xf32> to vector<8x32xbf16>
    %c0_10 = arith.constant 0 : index
    %c0_11 = arith.constant 0 : index
    %31 = vector.load %arg5[%c0_10, %c0_11] : memref<32x96xbf16, #tpu.memory_space<vmem>>, vector<32x96xbf16>
    %cst_12 = arith.constant dense<0.000000e+00> : vector<8x96xf32>
    %32 = tpu.matmul %30, %31, %cst_12 {dimension_numbers = #tpu.dot_dimension_numbers<[1], [0], [0], [1], [0, 0, 1, 1], [], []>} : vector<8x32xbf16>, vector<32x96xbf16>, vector<8x96xf32> -> vector<8x96xf32>
    %c0_13 = arith.constant 0 : index
    %c0_14 = arith.constant 0 : index
    %33 = vector.load %arg6[%c0_13, %c0_14] : memref<1x96xf32, #tpu.memory_space<vmem>>, vector<1x96xf32>
    %34 = vector.shape_cast %33 : vector<1x96xf32> to vector<96xf32>
    %35 = vector.shape_cast %34 : vector<96xf32> to vector<1x96xf32>
    %36 = vector.broadcast %35 : vector<1x96xf32> to vector<8x96xf32>
    %37 = arith.addf %32, %36 : vector<8x96xf32>
    %38 = vector.extract_strided_slice %37 {offsets = [0, 0], sizes = [8, 32], strides = [1, 1]} : vector<8x96xf32> to vector<8x32xf32>
    %39 = vector.shape_cast %38 : vector<8x32xf32> to vector<8x4x8xf32>
    %40 = tpu.transpose %39, [1, 0, 2] : vector<8x4x8xf32> -> vector<4x8x8xf32>
    %41 = arith.truncf %40 : vector<4x8x8xf32> to vector<4x8x8xbf16>
    %c0_15 = arith.constant 0 : index
    %c0_16 = arith.constant 0 : index
    %c0_17 = arith.constant 0 : index
    %c0_18 = arith.constant 0 : index
    %42 = vector.load %arg7[%c0_15, %c0_16, %c0_17, %c0_18] : memref<1x4x8x8xbf16, #tpu.memory_space<vmem>>, vector<1x4x8x8xbf16>
    %43 = vector.shape_cast %42 : vector<1x4x8x8xbf16> to vector<4x8x8xbf16>
    %44 = vector.shape_cast %41 : vector<4x8x8xbf16> to vector<1x4x8x8xbf16>
    tpu.vector_store %arg7[%c0_15, %c0_16, %c0_17, %c0_18], %44 {strides = array<i32>} : memref<1x4x8x8xbf16, #tpu.memory_space<vmem>>, vector<1x4x8x8xbf16>,
    %45 = vector.extract_strided_slice %37 {offsets = [0, 32], sizes = [8, 32], strides = [1, 1]} : vector<8x96xf32> to vector<8x32xf32>
    %46 = vector.shape_cast %45 : vector<8x32xf32> to vector<8x4x8xf32>
    %47 = tpu.transpose %46, [1, 0, 2] : vector<8x4x8xf32> -> vector<4x8x8xf32>
    %48 = arith.truncf %47 : vector<4x8x8xf32> to vector<4x8x8xbf16>
    %c0_19 = arith.constant 0 : index
    %c0_20 = arith.constant 0 : index
    %c0_21 = arith.constant 0 : index
    %c0_22 = arith.constant 0 : index
    %49 = vector.load %arg8[%c0_19, %c0_20, %c0_21, %c0_22] : memref<1x4x8x8xbf16, #tpu.memory_space<vmem>>, vector<1x4x8x8xbf16>
    %50 = vector.shape_cast %49 : vector<1x4x8x8xbf16> to vector<4x8x8xbf16>
    %51 = vector.shape_cast %48 : vector<4x8x8xbf16> to vector<1x4x8x8xbf16>
    tpu.vector_store %arg8[%c0_19, %c0_20, %c0_21, %c0_22], %51 {strides = array<i32>} : memref<1x4x8x8xbf16, #tpu.memory_space<vmem>>, vector<1x4x8x8xbf16>,
    %52 = vector.extract_strided_slice %37 {offsets = [0, 64], sizes = [8, 32], strides = [1, 1]} : vector<8x96xf32> to vector<8x32xf32>
    %53 = vector.shape_cast %52 : vector<8x32xf32> to vector<8x4x8xf32>
    %54 = tpu.transpose %53, [1, 0, 2] : vector<8x4x8xf32> -> vector<4x8x8xf32>
    %55 = arith.truncf %54 : vector<4x8x8xf32> to vector<4x8x8xbf16>
    %c0_23 = arith.constant 0 : index
    %c0_24 = arith.constant 0 : index
    %c0_25 = arith.constant 0 : index
    %c0_26 = arith.constant 0 : index
    %56 = vector.load %arg9[%c0_23, %c0_24, %c0_25, %c0_26] : memref<1x4x8x8xbf16, #tpu.memory_space<vmem>>, vector<1x4x8x8xbf16>
    %57 = vector.shape_cast %56 : vector<1x4x8x8xbf16> to vector<4x8x8xbf16>
    %58 = vector.shape_cast %55 : vector<4x8x8xbf16> to vector<1x4x8x8xbf16>
    tpu.vector_store %arg9[%c0_23, %c0_24, %c0_25, %c0_26], %58 {strides = array<i32>} : memref<1x4x8x8xbf16, #tpu.memory_space<vmem>>, vector<1x4x8x8xbf16>,
    return
  }
  func.func @transform_0(%arg0: i32, %arg1: i32) -> (i32, i32, i32) {
    %c0_i32 = arith.constant 0 : i32
    %c0_i32_0 = arith.constant 0 : i32
    return %arg0, %arg1, %c0_i32 : i32, i32, i32
  }
  func.func @transform_1(%arg0: i32, %arg1: i32) -> (i32, i32) {
    %c0_i32 = arith.constant 0 : i32
    %c0_i32_0 = arith.constant 0 : i32
    %c0_i32_1 = arith.constant 0 : i32
    return %c0_i32, %c0_i32_0 : i32, i32
  }
  func.func @transform_2(%arg0: i32, %arg1: i32) -> (i32, i32) {
    %c0_i32 = arith.constant 0 : i32
    %c0_i32_0 = arith.constant 0 : i32
    %c0_i32_1 = arith.constant 0 : i32
    return %c0_i32, %c0_i32_0 : i32, i32
  }
  func.func @transform_3(%arg0: i32, %arg1: i32) -> (i32, i32) {
    %c0_i32 = arith.constant 0 : i32
    %c0_i32_0 = arith.constant 0 : i32
    %c0_i32_1 = arith.constant 0 : i32
    return %c0_i32, %c0_i32_0 : i32, i32
  }
  func.func @transform_4(%arg0: i32, %arg1: i32) -> (i32, i32) {
    %c0_i32 = arith.constant 0 : i32
    %c0_i32_0 = arith.constant 0 : i32
    %c0_i32_1 = arith.constant 0 : i32
    return %c0_i32, %c0_i32_0 : i32, i32
  }
  func.func @transform_5(%arg0: i32, %arg1: i32) -> (i32, i32, i32, i32) {
    %c0_i32 = arith.constant 0 : i32
    %c0_i32_0 = arith.constant 0 : i32
    %c0_i32_1 = arith.constant 0 : i32
    return %arg0, %c0_i32, %arg1, %c0_i32_0 : i32, i32, i32, i32
  }
  func.func @transform_6(%arg0: i32, %arg1: i32) -> (i32, i32, i32, i32) {
    %c0_i32 = arith.constant 0 : i32
    %c0_i32_0 = arith.constant 0 : i32
    %c0_i32_1 = arith.constant 0 : i32
    return %arg0, %c0_i32, %arg1, %c0_i32_0 : i32, i32, i32, i32
  }
  func.func @transform_7(%arg0: i32, %arg1: i32) -> (i32, i32, i32, i32) {
    %c0_i32 = arith.constant 0 : i32
    %c0_i32_0 = arith.constant 0 : i32
    %c0_i32_1 = arith.constant 0 : i32
    return %arg0, %c0_i32, %arg1, %c0_i32_0 : i32, i32, i32, i32
  }
}

</mosaic_0001>

<llo_original>
// kernel: tpu_custom_call.1
$region0: #{tpu_custom_call.1}
  #allocation0 [shape = 'u32[]', space=smem, size = 0x4, offset = 0x4, fixed_abs, tag = 'smem constant byte address 0x4 - core index']
  #allocation1 [shape = 'u32[144,128]{1,0:T(1,128)}', space=vmem, size = 0x12000, scoped, tag = 'internal scratch']
  %s0 = inlined_call_operand.hbm [shape: f32[2,8,32], index: 0, kind: input, shape index: {}]
  %s1 = inlined_call_operand.vmem [shape: f32[1,32], index: 1, kind: input, shape index: {}]
  %s2 = inlined_call_operand.vmem [shape: f32[1,32], index: 2, kind: input, shape index: {}]
  %s3 = inlined_call_operand.hbm [shape: bf16[32,96], index: 3, kind: input, shape index: {}]
  %s4 = inlined_call_operand.vmem [shape: f32[1,96], index: 4, kind: input, shape index: {}]
  %s5 = inlined_call_operand.hbm [shape: bf16[2,4,8,8], index: 5, kind: output, shape index: {0}]
  %s6 = inlined_call_operand.hbm [shape: bf16[2,4,8,8], index: 6, kind: output, shape index: {1}]
  %s7 = inlined_call_operand.hbm [shape: bf16[2,4,8,8], index: 7, kind: output, shape index: {2}]
  %8 = xla_tuple %s5, %s6, %s7
  %s9 = sld [smem:[#allocation0]]
  $region77: #{tpu_custom_call.1} parent=0
    _
  %s11 = ssub.s32 1, %s9
  %s12 = scalar_select 0, %s11, %s9
  $region1: #{tpu_custom_call.1} parent=0
    #allocation2 [shape = 'u8[8192]{0}', space=vmem, size = 0x2000, scoped, tag = 'input window, operand 0']
    #allocation3 [shape = 's32[2]{0}', space=sflag, size = 0x8, scoped, tag = 'scoped memory for tpu_custom_call.1']
    #allocation4 [shape = 's32[2]{0}', space=sflag, size = 0x8, scoped, tag = 'scoped memory for tpu_custom_call.1']
    #allocation5 [shape = 'u8[8192]{0}', space=vmem, size = 0x2000, scoped, tag = 'input window, operand 3, single buffered']
    #allocation6 [shape = 's32[1]{0}', space=sflag, size = 0x4, scoped, tag = 'scoped memory for tpu_custom_call.1']
    #allocation7 [shape = 'u8[16384]{0}', space=vmem, size = 0x4000, scoped, tag = 'output window, operand 0']
    #allocation8 [shape = 'u8[16384]{0}', space=vmem, size = 0x4000, scoped, tag = 'output window, operand 1']
    #allocation9 [shape = 's32[2]{0}', space=sflag, size = 0x8, scoped, tag = 'scoped memory for tpu_custom_call.1']
    #allocation10 [shape = 'u8[16384]{0}', space=vmem, size = 0x4000, scoped, tag = 'output window, operand 2']
    %13 = vsyncpa [#allocation3], 0
    %s14 = scalar_lea.sflag [#allocation3], 1
    %15 = vsyncpa %s14, 0
    %16 = vsyncpa [#allocation6], 0
    %17 = vsyncpa [#allocation4], 0
    %s18 = scalar_lea.sflag [#allocation4], 1
    %19 = vsyncpa %s18, 0
    %20 = vsyncpa [#allocation9], 0
    %s21 = scalar_lea.sflag [#allocation9], 1
    %22 = vsyncpa %s21, 0
    loop: start=0, step=1, limit=4
    $region2: #{tpu_custom_call.1} parent=1 // loop_pre_header
      _
    $region3: #{tpu_custom_call.1} parent=1 // loop_header
      %s24 = sphi 0, %s28
      %p25 = scmp.ge.s32.totalorder %s24, 4
      %s31 = sphi 0, %s43
      %s32 = sphi 0, %s39
      %s33 = sphi 0, %s31
      %s34 = sphi 0, %s32
      %s35 = sphi 0, %s33
      %s36 = sphi 0, %s34
      %s48 = sphi 0, %s50
      %s51 = sphi 0, %s48
      %s52 = sphi 0, %s51
      %s68 = sphi 0, %s52
      %s72 = sphi 0, %s72
      %s74 = sphi 0, %s72
      %s75 = sphi 0, %s74
      %s89 = sphi 0, %s75
      %s93 = sphi 0, %s93
      %s95 = sphi 0, %s93
      %s96 = sphi 0, %s95
      %s110 = sphi 0, %s96
      %s114 = sphi 0, %s114
      %s116 = sphi 0, %s114
      %s117 = sphi 0, %s116
      %s131 = sphi 0, %s117
      %s135 = sphi 0, %s135
      %s137 = sphi 0, %s135
      %s138 = sphi 0, %s137
      %s152 = sphi 0, %s138
      %s160 = sphi 0, %s162
      %s163 = sphi 0, %s160
      %s164 = sphi 0, %s163
      %s180 = sphi 0, %s164
      %s188 = sphi 0, %s190
      %s191 = sphi 0, %s188
      %s192 = sphi 0, %s191
      %s208 = sphi 0, %s192
      %s216 = sphi 0, %s218
      %s219 = sphi 0, %s216
      %s220 = sphi 0, %s219
      %s236 = sphi 0, %s220
    $region4: #{tpu_custom_call.1} parent=1 // loop_header_branch
      %27 = sbr.rel (%p25) target = $region8
    $region5: #{tpu_custom_call.1} parent=1 // loop_body
      %s29 = ssub.s32 %s24, 1
      %s30 = ssub.s32 %s24, 2
      %s37 = sadd.s32 1, %s32
      %p38 = scmp.ge.s32.totalorder %s37, 1
      %s39 = scalar_select %p38, 0, %s37
      %s40 = sadd.s32 1, %s31
      %s41 = scalar_select %p38, %s40, %s31
      %p42 = scmp.ge.s32.totalorder %s41, 2
      %s43 = scalar_select %p42, 0, %s41
      %s44 = ssub.s32 %s31, %s43
      %s45 = ssub.s32 %s32, %s39
      %s46 = sor.u32 %s44, %s45
      %p47 = scmp.eq.s32.totalorder %s46, 0
      %s49 = sadd.s32 %s48, 1
      %s50 = scalar_select %p47, %s48, %s49
      %p53 = pneg %p47
      %p54 = scmp.eq.s32.totalorder %s24, 1
      %p55 = por %p53, %p54
      %p56 = scmp.ne.s32.totalorder %s48, %s51
      %p57 = scmp.eq.s32.totalorder %s24, 0
      %p58 = por %p56, %p57
      %p59 = scmp.ne.s32.totalorder %s48, %s51
      %p60 = scmp.eq.s32.totalorder %s29, 1
      %p61 = por %p59, %p60
      %p62 = scmp.ne.s32.totalorder %s51, %s52
      %p63 = scmp.eq.s32.totalorder %s29, 0
      %p64 = por %p62, %p63
      %p65 = scmp.ne.s32.totalorder %s51, %s52
      %p66 = scmp.eq.s32.totalorder %s30, 1
      %p67 = por %p65, %p66
      %p69 = scmp.ne.s32.totalorder %s52, %s68
      %p70 = scmp.eq.s32.totalorder %s30, 0
      %p71 = por %p69, %p70
      %s73 = sadd.s32 %s72, 1
      %p76 = scmp.eq.s32.totalorder %s24, 1
      %p77 = scmp.ne.s32.totalorder %s72, %s74
      %p78 = scmp.eq.s32.totalorder %s24, 0
      %p79 = por %p77, %p78
      %p80 = scmp.ne.s32.totalorder %s72, %s74
      %p81 = scmp.eq.s32.totalorder %s29, 1
      %p82 = por %p80, %p81
      %p83 = scmp.ne.s32.totalorder %s74, %s75
      %p84 = scmp.eq.s32.totalorder %s29, 0
      %p85 = por %p83, %p84
      %p86 = scmp.ne.s32.totalorder %s74, %s75
      %p87 = scmp.eq.s32.totalorder %s30, 1
      %p88 = por %p86, %p87
      %p90 = scmp.ne.s32.totalorder %s75, %s89
      %p91 = scmp.eq.s32.totalorder %s30, 0
      %p92 = por %p90, %p91
      %s94 = sadd.s32 %s93, 1
      %p97 = scmp.eq.s32.totalorder %s24, 1
      %p98 = scmp.ne.s32.totalorder %s93, %s95
      %p99 = scmp.eq.s32.totalorder %s24, 0
      %p100 = por %p98, %p99
      %p101 = scmp.ne.s32.totalorder %s93, %s95
      %p102 = scmp.eq.s32.totalorder %s29, 1
      %p103 = por %p101, %p102
      %p104 = scmp.ne.s32.totalorder %s95, %s96
      %p105 = scmp.eq.s32.totalorder %s29, 0
      %p106 = por %p104, %p105
      %p107 = scmp.ne.s32.totalorder %s95, %s96
      %p108 = scmp.eq.s32.totalorder %s30, 1
      %p109 = por %p107, %p108
      %p111 = scmp.ne.s32.totalorder %s96, %s110
      %p112 = scmp.eq.s32.totalorder %s30, 0
      %p113 = por %p111, %p112
      %s115 = sadd.s32 %s114, 1
      %p118 = scmp.eq.s32.totalorder %s24, 1
      %p119 = scmp.ne.s32.totalorder %s114, %s116
      %p120 = scmp.eq.s32.totalorder %s24, 0
      %p121 = por %p119, %p120
      %p122 = scmp.ne.s32.totalorder %s114, %s116
      %p123 = scmp.eq.s32.totalorder %s29, 1
      %p124 = por %p122, %p123
      %p125 = scmp.ne.s32.totalorder %s116, %s117
      %p126 = scmp.eq.s32.totalorder %s29, 0
      %p127 = por %p125, %p126
      %p128 = scmp.ne.s32.totalorder %s116, %s117
      %p129 = scmp.eq.s32.totalorder %s30, 1
      %p130 = por %p128, %p129
      %p132 = scmp.ne.s32.totalorder %s117, %s131
      %p133 = scmp.eq.s32.totalorder %s30, 0
      %p134 = por %p132, %p133
      %s136 = sadd.s32 %s135, 1
      %p139 = scmp.eq.s32.totalorder %s24, 1
      %p140 = scmp.ne.s32.totalorder %s135, %s137
      %p141 = scmp.eq.s32.totalorder %s24, 0
      %p142 = por %p140, %p141
      %p143 = scmp.ne.s32.totalorder %s135, %s137
      %p144 = scmp.eq.s32.totalorder %s29, 1
      %p145 = por %p143, %p144
      %p146 = scmp.ne.s32.totalorder %s137, %s138
      %p147 = scmp.eq.s32.totalorder %s29, 0
      %p148 = por %p146, %p147
      %p149 = scmp.ne.s32.totalorder %s137, %s138
      %p150 = scmp.eq.s32.totalorder %s30, 1
      %p151 = por %p149, %p150
      %p153 = scmp.ne.s32.totalorder %s138, %s152
      %p154 = scmp.eq.s32.totalorder %s30, 0
      %p155 = por %p153, %p154
      %s156 = ssub.s32 %s31, %s43
      %s157 = ssub.s32 %s32, %s39
      %s158 = sor.u32 %s156, %s157
      %p159 = scmp.eq.s32.totalorder %s158, 0
      %s161 = sadd.s32 %s160, 1
      %s162 = scalar_select %p159, %s160, %s161
      %p165 = pneg %p159
      %p166 = scmp.eq.s32.totalorder %s24, 1
      %p167 = por %p165, %p166
      %p168 = scmp.ne.s32.totalorder %s160, %s163
      %p169 = scmp.eq.s32.totalorder %s24, 0
      %p170 = por %p168, %p169
      %p171 = scmp.ne.s32.totalorder %s160, %s163
      %p172 = scmp.eq.s32.totalorder %s29, 1
      %p173 = por %p171, %p172
      %p174 = scmp.ne.s32.totalorder %s163, %s164
      %p175 = scmp.eq.s32.totalorder %s29, 0
      %p176 = por %p174, %p175
      %p177 = scmp.ne.s32.totalorder %s163, %s164
      %p178 = scmp.eq.s32.totalorder %s30, 1
      %p179 = por %p177, %p178
      %p181 = scmp.ne.s32.totalorder %s164, %s180
      %p182 = scmp.eq.s32.totalorder %s30, 0
      %p183 = por %p181, %p182
      %s184 = ssub.s32 %s31, %s43
      %s185 = ssub.s32 %s32, %s39
      %s186 = sor.u32 %s184, %s185
      %p187 = scmp.eq.s32.totalorder %s186, 0
      %s189 = sadd.s32 %s188, 1
      %s190 = scalar_select %p187, %s188, %s189
      %p193 = pneg %p187
      %p194 = scmp.eq.s32.totalorder %s24, 1
      %p195 = por %p193, %p194
      %p196 = scmp.ne.s32.totalorder %s188, %s191
      %p197 = scmp.eq.s32.totalorder %s24, 0
      %p198 = por %p196, %p197
      %p199 = scmp.ne.s32.totalorder %s188, %s191
      %p200 = scmp.eq.s32.totalorder %s29, 1
      %p201 = por %p199, %p200
      %p202 = scmp.ne.s32.totalorder %s191, %s192
      %p203 = scmp.eq.s32.totalorder %s29, 0
      %p204 = por %p202, %p203
      %p205 = scmp.ne.s32.totalorder %s191, %s192
      %p206 = scmp.eq.s32.totalorder %s30, 1
      %p207 = por %p205, %p206
      %p209 = scmp.ne.s32.totalorder %s192, %s208
      %p210 = scmp.eq.s32.totalorder %s30, 0
      %p211 = por %p209, %p210
      %s212 = ssub.s32 %s31, %s43
      %s213 = ssub.s32 %s32, %s39
      %s214 = sor.u32 %s212, %s213
      %p215 = scmp.eq.s32.totalorder %s214, 0
      %s217 = sadd.s32 %s216, 1
      %s218 = scalar_select %p215, %s216, %s217
      %p221 = pneg %p215
      %p222 = scmp.eq.s32.totalorder %s24, 1
      %p223 = por %p221, %p222
      %p224 = scmp.ne.s32.totalorder %s216, %s219
      %p225 = scmp.eq.s32.totalorder %s24, 0
      %p226 = por %p224, %p225
      %p227 = scmp.ne.s32.totalorder %s216, %s219
      %p228 = scmp.eq.s32.totalorder %s29, 1
      %p229 = por %p227, %p228
      %p230 = scmp.ne.s32.totalorder %s219, %s220
      %p231 = scmp.eq.s32.totalorder %s29, 0
      %p232 = por %p230, %p231
      %p233 = scmp.ne.s32.totalorder %s219, %s220
      %p234 = scmp.eq.s32.totalorder %s30, 1
      %p235 = por %p233, %p234
      %p237 = scmp.ne.s32.totalorder %s220, %s236
      %p238 = scmp.eq.s32.totalorder %s30, 0
      %p239 = por %p237, %p238
      %p240 = scmp.le.s32.totalorder 1, %s24
      %p241 = scmp.lt.s32.totalorder %s24, 3
      %p242 = pnand %p240, %p241
      %p243 = pneg %p242
      // Predicated region
      $region9: #{tpu_custom_call.1} parent=5 // pred_check
        _
      $region10: #{tpu_custom_call.1} parent=5 // pred_check_branch
        %245 = sbr.rel (%p242) target = $region12
      $region11: #{tpu_custom_call.1} parent=5 // pred_region
        %s246 = ssub.s32 %s24, 1
        // Predicated region
        $region13: #{tpu_custom_call.1} parent=11 // pred_check
          %p247 = pneg %p85
        $region14: #{tpu_custom_call.1} parent=11 // pred_check_branch
          %249 = sbr.rel (%p247) target = $region16
        $region15: #{tpu_custom_call.1} parent=11 // pred_region
          _
        $region16: #{tpu_custom_call.1} parent=11 // pred_fallthru
          _
        // Predicated region
        $region17: #{tpu_custom_call.1} parent=11 // pred_check
          %p250 = pneg %p106
        $region18: #{tpu_custom_call.1} parent=11 // pred_check_branch
          %252 = sbr.rel (%p250) target = $region20
        $region19: #{tpu_custom_call.1} parent=11 // pred_region
          _
        $region20: #{tpu_custom_call.1} parent=11 // pred_fallthru
          _
        // Predicated region
        $region21: #{tpu_custom_call.1} parent=11 // pred_check
          %p253 = pneg %p127
        $region22: #{tpu_custom_call.1} parent=11 // pred_check_branch
          %255 = sbr.rel (%p253) target = $region24
        $region23: #{tpu_custom_call.1} parent=11 // pred_region
          %s257 = ssub.s32 256, 256
          %258 = vsyncadd [#allocation6], %s257
          %s259 = sshll.u32 [#allocation5], 4
          %s260 = int_to_ptr.vmem [resolvable:$true] %s259
          %265 = dma.hbm_to_vmem [thread:$0]  %s3, 256, %s260, [#allocation6], 64, 64, 4
        $region24: #{tpu_custom_call.1} parent=11 // pred_fallthru
          _
        // Predicated region
        $region25: #{tpu_custom_call.1} parent=11 // pred_check
          %p266 = pneg %p148
        $region26: #{tpu_custom_call.1} parent=11 // pred_check_branch
          %268 = sbr.rel (%p266) target = $region28
        $region27: #{tpu_custom_call.1} parent=11 // pred_region
          _
        $region28: #{tpu_custom_call.1} parent=11 // pred_fallthru
          _
      $region12: #{tpu_custom_call.1} parent=5 // pred_fallthru
        _
      %p269 = scmp.lt.s32.totalorder %s24, 2
      // Predicated region
      $region29: #{tpu_custom_call.1} parent=5 // pred_check
        %p270 = pneg %p269
      $region30: #{tpu_custom_call.1} parent=5 // pred_check_branch
        %272 = sbr.rel (%p270) target = $region32
      $region31: #{tpu_custom_call.1} parent=5 // pred_region
        // Predicated region
        $region33: #{tpu_custom_call.1} parent=31 // pred_check
          %p273 = pneg %p58
        $region34: #{tpu_custom_call.1} parent=31 // pred_check_branch
          %275 = sbr.rel (%p273) target = $region36
        $region35: #{tpu_custom_call.1} parent=31 // pred_region
          %s276 = sand.u32 %s48, 1
          %s277 = scalar_lea.sflag [#allocation3], %s276
          %s278 = sand.u32 %s48, 1
          %s279 = smul.addr %s278, 8
          %s280 = scalar_lea.vmem [#allocation2], %s279
          %s282 = ssub.s32 128, 128
          %283 = vsyncadd %s277, %s282
          %s284 = sadd.s32 %s32, %s31
          %s285 = smul.addr %s284, 128
          %s286 = scalar_lea.hbm %s0, %s285
          %s288 = sshll.u32 %s280, 4
          %s289 = int_to_ptr.vmem [resolvable:$true] %s288
          %291 = dma.hbm_to_vmem [thread:$0]  %s286, 128, %s289, %s277
        $region36: #{tpu_custom_call.1} parent=31 // pred_fallthru
          _
      $region32: #{tpu_custom_call.1} parent=5 // pred_fallthru
        _
      %p292 = scmp.le.s32.totalorder 1, %s24
      %p293 = scmp.lt.s32.totalorder %s24, 3
      %p294 = pnand %p292, %p293
      %p295 = pneg %p294
      // Predicated region
      $region37: #{tpu_custom_call.1} parent=5 // pred_check
        _
      $region38: #{tpu_custom_call.1} parent=5 // pred_check_branch
        %297 = sbr.rel (%p294) target = $region40
      $region39: #{tpu_custom_call.1} parent=5 // pred_region
        %s298 = ssub.s32 %s24, 1
        %s299 = sand.u32 %s51, 1
        %s300 = scalar_lea.sflag [#allocation3], %s299
        %s301 = sand.u32 %s51, 1
        %s302 = smul.addr %s301, 8
        %s303 = scalar_lea.vmem [#allocation2], %s302
        // Predicated region
        $region41: #{tpu_custom_call.1} parent=39 // pred_check
          %p304 = pneg %p64
        $region42: #{tpu_custom_call.1} parent=39 // pred_check_branch
          %306 = sbr.rel (%p304) target = $region44
        $region43: #{tpu_custom_call.1} parent=39 // pred_region
          %307 = dma.done %s300, 128
        $region44: #{tpu_custom_call.1} parent=39 // pred_fallthru
          _
        // Predicated region
        $region45: #{tpu_custom_call.1} parent=39 // pred_check
          %p308 = pneg %p127
        $region46: #{tpu_custom_call.1} parent=39 // pred_check_branch
          %310 = sbr.rel (%p308) target = $region48
        $region47: #{tpu_custom_call.1} parent=39 // pred_region
          %311 = dma.done [#allocation6], 256
        $region48: #{tpu_custom_call.1} parent=39 // pred_fallthru
          _
        %s312 = sand.u32 %s51, 1
        %s313 = scalar_lea.sflag [#allocation3], %s312
        %s314 = sand.u32 %s51, 1
        %s315 = smul.addr %s314, 8
        %s316 = scalar_lea.vmem [#allocation2], %s315
        %p317 = pneg %p64
        %p318 = pneg %p61
        %p319 = pneg %p85
        %p320 = pneg %p82
        %p321 = pneg %p106
        %p322 = pneg %p103
        %p323 = pneg %p127
        %p324 = pneg %p124
        %p325 = pneg %p148
        %p326 = pneg %p145
        %p327 = pneg %p176
        %p328 = pneg %p173
        %s329 = sand.u32 %s163, 1
        %s330 = scalar_lea.sflag [#allocation4], %s329
        %s331 = sand.u32 %s163, 1
        %s332 = smul.addr %s331, 16
        %s333 = scalar_lea.vmem [#allocation7], %s332
        %p334 = pneg %p204
        %p335 = pneg %p201
        %s336 = sand.u32 %s29, 1
        %s337 = scalar_lea.sflag [#allocation9], %s336
        %s338 = sand.u32 %s191, 1
        %s339 = smul.addr %s338, 16
        %s340 = scalar_lea.vmem [#allocation8], %s339
        %p341 = pneg %p232
        %p342 = pneg %p229
        %s343 = sand.u32 %s29, 1
        %s344 = scalar_lea.sflag [#allocation9], %s343
        %s345 = sand.u32 %s219, 1
        %s346 = smul.addr %s345, 16
        %s347 = scalar_lea.vmem [#allocation10], %s346
        %v349 = vld [vmem:[%s303] sm:$0xff]
        %v350 = vld [vmem:[%s1] sm:$0x1]
        %v351 = vld [vmem:[%s2] sm:$0x1]
        %vm352 = vcmask 261120
        %v353 = vsel %vm352, %v349, 0.0
        %354 = vadd.xlane.f32.xlu0 %v353
        %v355 = vpop.xlane.xlu0 %354
        %v356 = vrcp.pop 32.0
        %v357 = vmul.f32 %v355, %v356
        %v358 = vsub.f32 %v349, %v357
        %v359 = vmul.f32 %v358, %v358
        %v360 = vsel %vm352, %v359, 0.0
        %361 = vadd.xlane.f32.xlu0 %v360
        %v362 = vpop.xlane.xlu0 %361
        %v363 = vmul.f32 %v362, %v356
        %v364 = vadd.f32 %v363, 1e-12
        %v365 = vrsqrt.pop %v364
        %v366 = vmul.f32 %v358, %v365
        %v368 = vlaneseq
        %v369 = vshrl.u32 %v368, 7
        %v370 = vsub.s32 0, %v369
        %v371 = vrot.slane %v350, %v370
        %v373 = vmul.f32 %v366, %v371
        %v375 = vlaneseq
        %v376 = vshrl.u32 %v375, 7
        %v377 = vsub.s32 0, %v376
        %v378 = vrot.slane %v351, %v377
        %v380 = vadd.f32 %v373, %v378
        %v381 = vpack.c.bf16 %v380, %v380
        %v382 = vld [vmem:[#allocation5] sm:$0xf]
        %v383 = vld [vmem:[#allocation5 + $0x4] sm:$0xf]
        %v384 = vld [vmem:[#allocation5 + $0x8] sm:$0xf]
        %v385 = vld [vmem:[#allocation5 + $0xc] sm:$0xf]
        %v386 = vld [vmem:[%s4] sm:$0x1]
        %v388 = vlaneseq
        %v389 = vshrl.u32 %v388, 7
        %v390 = vsub.s32 0, %v389
        %v391 = vrot.slane %v386, %v390
        %v397 = vunpack.c.l.b16 %v382
        %v398 = vunpack.c.l.b16 %v383
        %v399 = vunpack.c.l.b16 %v384
        %v400 = vunpack.c.l.b16 %v385
        %v401 = vpack.c.b16 %v398, %v397
        %v402 = vpack.c.b16 %v400, %v399
        %v406 = vsel %vm352, %v381, 0
        %408 = vmatprep.subr.bf16.mxu0 0
        %409 = vmatpush1.bf16.msra.mxu0 0
        %410 = vmatprep.subr.bf16.mxu0 0
        %411 = vmatpush1.bf16.msra.mxu0 0
        %412 = vmatprep.subr.bf16.mxu0 0
        %413 = vmatpush1.bf16.msra.mxu0 0
        %414 = vmatprep.subr.bf16.mxu0 0
        %415 = vmatpush1.bf16.msra.mxu0 0
        %416 = vmatprep.subr.bf16.mxu0 0
        %417 = vmatpush1.bf16.msra.mxu0 0
        %418 = vmatprep.subr.bf16.mxu0 0
        %419 = vmatpush1.bf16.msra.mxu0 0
        %420 = vmatprep.subr.bf16.mxu0 0
        %421 = vmatpush1.bf16.msra.mxu0 %v402
        %422 = vmatprep.subr.bf16.mxu0 0
        %423 = vmatpush1.bf16.msra.mxu0 %v401
        %424 = vmatprep.subr.bf16.mxu0 0
        %425 = vmatpush2.bf16.msra.mxu0 0
        %426 = vmatprep.subr.bf16.mxu0 0
        %427 = vmatpush2.bf16.msra.mxu0 0
        %428 = vmatprep.subr.bf16.mxu0 0
        %429 = vmatpush2.bf16.msra.mxu0 0
        %430 = vmatprep.subr.bf16.mxu0 0
        %431 = vmatpush2.bf16.msra.mxu0 0
        %432 = vmatprep.subr.bf16.mxu0 0
        %433 = vmatpush2.bf16.msra.mxu0 0
        %434 = vmatprep.subr.bf16.mxu0 0
        %435 = vmatpush2.bf16.msra.mxu0 0
        %436 = vmatprep.subr.bf16.mxu0 0
        %437 = vmatpush2.bf16.msra.mxu0 0
        %438 = vmatprep.subr.bf16.mxu0 0
        %439 = vmatpush2.bf16.msra.mxu0 0
        %440 = vmatprep.mubr.bf16.mxu0 0
        %441 = vmatmul.mubr.bf16.gmra.mxu0 %v406
        %v442 = vpop.f32.mrf.mxu0
        %v443 = vadd.f32 %v391, %v442
        %v444 = vpop.f32.mrf.mxu0
        %v445 = vpop.f32.mrf.mxu0
        %v446 = vpop.f32.mrf.mxu0
        %447 = vdwg.mxu0
        %449 = vrot.lane.b32.xlu0 %v443, 120
        %v450 = vpop.permute.xlu0 %449
        %452 = vrot.lane.b32.xlu0 %v443, 112
        %v453 = vpop.permute.xlu0 %452
        %455 = vrot.lane.b32.xlu0 %v443, 104
        %v456 = vpop.permute.xlu0 %455
        %v458 = vcombine.low %v443, %v453
        %v459 = vcombine.high %v443, %v453
        %v461 = vunpack.c.l.s4 1983009808
        %v462 = vunpack.c.0.s8 %v461
        %v463 = vlaneseq
        %v464 = vshrl.u32 %v463, 7
        %v465 = vsub.s32 %v462, %v464
        %v466 = vrot.slane %v458, %v465
        %v468 = vunpack.c.l.s4 1983009808
        %v469 = vunpack.c.0.s8 %v468
        %v470 = vlaneseq
        %v471 = vshrl.u32 %v470, 7
        %v472 = vsub.s32 %v469, %v471
        %v473 = vrot.slane %v459, %v472
        %v474 = vcombine.low %v450, %v456
        %v475 = vcombine.high %v450, %v456
        %v477 = vunpack.c.l.s4 1983009808
        %v478 = vunpack.c.0.s8 %v477
        %v479 = vlaneseq
        %v480 = vshrl.u32 %v479, 7
        %v481 = vsub.s32 %v478, %v480
        %v482 = vrot.slane %v474, %v481
        %v484 = vunpack.c.l.s4 1983009808
        %v485 = vunpack.c.0.s8 %v484
        %v486 = vlaneseq
        %v487 = vshrl.u32 %v486, 7
        %v488 = vsub.s32 %v485, %v487
        %v489 = vrot.slane %v475, %v488
        %v490 = vcombine.low %v466, %v482
        %v491 = vcombine.high %v466, %v482
        %v493 = vunpack.c.l.s4 1934713408
        %v494 = vunpack.c.0.s8 %v493
        %v495 = vlaneseq
        %v496 = vshrl.u32 %v495, 7
        %v497 = vsub.s32 %v494, %v496
        %v498 = vrot.slane %v490, %v497
        %v500 = vunpack.c.l.s4 1934713408
        %v501 = vunpack.c.0.s8 %v500
        %v502 = vlaneseq
        %v503 = vshrl.u32 %v502, 7
        %v504 = vsub.s32 %v501, %v503
        %v505 = vrot.slane %v491, %v504
        %v506 = vcombine.low %v473, %v489
        %v507 = vcombine.high %v473, %v489
        %v509 = vunpack.c.l.s4 1934713408
        %v510 = vunpack.c.0.s8 %v509
        %v511 = vlaneseq
        %v512 = vshrl.u32 %v511, 7
        %v513 = vsub.s32 %v510, %v512
        %v514 = vrot.slane %v506, %v513
        %v516 = vunpack.c.l.s4 1934713408
        %v517 = vunpack.c.0.s8 %v516
        %v518 = vlaneseq
        %v519 = vshrl.u32 %v518, 7
        %v520 = vsub.s32 %v517, %v519
        %v521 = vrot.slane %v507, %v520
        %v522 = vcombine.high %v498, 0.0
        %v523 = vcombine.high %v505, 0.0
        %v524 = vcombine.high %v514, 0.0
        %v525 = vcombine.high %v521, 0.0
        %v526 = vcombine.low %v498, %v505
        %v528 = vunpack.c.l.s4 1983009808
        %v529 = vunpack.c.0.s8 %v528
        %v530 = vlaneseq
        %v531 = vshrl.u32 %v530, 7
        %v532 = vsub.s32 %v529, %v531
        %v533 = vrot.slane %v526, %v532
        %v534 = vcombine.low %v522, %v523
        %v536 = vunpack.c.l.s4 1983009808
        %v537 = vunpack.c.0.s8 %v536
        %v538 = vlaneseq
        %v539 = vshrl.u32 %v538, 7
        %v540 = vsub.s32 %v537, %v539
        %v541 = vrot.slane %v534, %v540
        %v542 = vcombine.low %v514, %v521
        %v544 = vunpack.c.l.s4 1983009808
        %v545 = vunpack.c.0.s8 %v544
        %v546 = vlaneseq
        %v547 = vshrl.u32 %v546, 7
        %v548 = vsub.s32 %v545, %v547
        %v549 = vrot.slane %v542, %v548
        %v550 = vcombine.low %v524, %v525
        %v552 = vunpack.c.l.s4 1983009808
        %v553 = vunpack.c.0.s8 %v552
        %v554 = vlaneseq
        %v555 = vshrl.u32 %v554, 7
        %v556 = vsub.s32 %v553, %v555
        %v557 = vrot.slane %v550, %v556
        %v558 = vcombine.low %v533, %v541
        %v559 = vcombine.high %v533, %v541
        %v561 = vunpack.c.l.s4 1934713408
        %v562 = vunpack.c.0.s8 %v561
        %v563 = vlaneseq
        %v564 = vshrl.u32 %v563, 7
        %v565 = vsub.s32 %v562, %v564
        %v566 = vrot.slane %v558, %v565
        %v568 = vunpack.c.l.s4 1934713408
        %v569 = vunpack.c.0.s8 %v568
        %v570 = vlaneseq
        %v571 = vshrl.u32 %v570, 7
        %v572 = vsub.s32 %v569, %v571
        %v573 = vrot.slane %v559, %v572
        %v574 = vcombine.low %v549, %v557
        %v575 = vcombine.high %v549, %v557
        %v577 = vunpack.c.l.s4 1934713408
        %v578 = vunpack.c.0.s8 %v577
        %v579 = vlaneseq
        %v580 = vshrl.u32 %v579, 7
        %v581 = vsub.s32 %v578, %v580
        %v582 = vrot.slane %v574, %v581
        %v584 = vunpack.c.l.s4 1934713408
        %v585 = vunpack.c.0.s8 %v584
        %v586 = vlaneseq
        %v587 = vshrl.u32 %v586, 7
        %v588 = vsub.s32 %v585, %v587
        %v589 = vrot.slane %v575, %v588
        %v590 = vcombine.low %v566, %v582
        %v591 = vcombine.high %v566, %v582
        %v592 = vcombine.low %v573, %v589
        %v593 = vcombine.high %v573, %v589
        %v594 = vpack.c.bf16 %v590, %v590
        %v595 = vpack.c.bf16 %v591, %v591
        %v596 = vpack.c.bf16 %v592, %v592
        %v597 = vpack.c.bf16 %v593, %v593
        %vm598 = vcmask 60416
        %599 = vst.msk [vmem:[%s333] sm:$0xf] %vm598, %v594
        %600 = vst.msk [vmem:[%s333 + $0x4] sm:$0xf] %vm598, %v595
        %601 = vst.msk [vmem:[%s333 + $0x8] sm:$0xf] %vm598, %v596
        %602 = vst.msk [vmem:[%s333 + $0xc] sm:$0xf] %vm598, %v597
        %603 = vrot.lane.b32.xlu0 %v443, 96
        %v604 = vpop.permute.xlu0 %603
        %605 = vrot.lane.b32.xlu0 %v450, 96
        %v606 = vpop.permute.xlu0 %605
        %607 = vrot.lane.b32.xlu0 %v453, 96
        %v608 = vpop.permute.xlu0 %607
        %609 = vrot.lane.b32.xlu0 %v456, 96
        %v610 = vpop.permute.xlu0 %609
        %v615 = vcombine.low %v604, %v608
        %v616 = vcombine.high %v604, %v608
        %v618 = vunpack.c.l.s4 1983009808
        %v619 = vunpack.c.0.s8 %v618
        %v620 = vlaneseq
        %v621 = vshrl.u32 %v620, 7
        %v622 = vsub.s32 %v619, %v621
        %v623 = vrot.slane %v615, %v622
        %v625 = vunpack.c.l.s4 1983009808
        %v626 = vunpack.c.0.s8 %v625
        %v627 = vlaneseq
        %v628 = vshrl.u32 %v627, 7
        %v629 = vsub.s32 %v626, %v628
        %v630 = vrot.slane %v616, %v629
        %v631 = vcombine.low %v606, %v610
        %v632 = vcombine.high %v606, %v610
        %v634 = vunpack.c.l.s4 1983009808
        %v635 = vunpack.c.0.s8 %v634
        %v636 = vlaneseq
        %v637 = vshrl.u32 %v636, 7
        %v638 = vsub.s32 %v635, %v637
        %v639 = vrot.slane %v631, %v638
        %v641 = vunpack.c.l.s4 1983009808
        %v642 = vunpack.c.0.s8 %v641
        %v643 = vlaneseq
        %v644 = vshrl.u32 %v643, 7
        %v645 = vsub.s32 %v642, %v644
        %v646 = vrot.slane %v632, %v645
        %v647 = vcombine.low %v623, %v639
        %v648 = vcombine.high %v623, %v639
        %v650 = vunpack.c.l.s4 1934713408
        %v651 = vunpack.c.0.s8 %v650
        %v652 = vlaneseq
        %v653 = vshrl.u32 %v652, 7
        %v654 = vsub.s32 %v651, %v653
        %v655 = vrot.slane %v647, %v654
        %v657 = vunpack.c.l.s4 1934713408
        %v658 = vunpack.c.0.s8 %v657
        %v659 = vlaneseq
        %v660 = vshrl.u32 %v659, 7
        %v661 = vsub.s32 %v658, %v660
        %v662 = vrot.slane %v648, %v661
        %v663 = vcombine.low %v630, %v646
        %v664 = vcombine.high %v630, %v646
        %v666 = vunpack.c.l.s4 1934713408
        %v667 = vunpack.c.0.s8 %v666
        %v668 = vlaneseq
        %v669 = vshrl.u32 %v668, 7
        %v670 = vsub.s32 %v667, %v669
        %v671 = vrot.slane %v663, %v670
        %v673 = vunpack.c.l.s4 1934713408
        %v674 = vunpack.c.0.s8 %v673
        %v675 = vlaneseq
        %v676 = vshrl.u32 %v675, 7
        %v677 = vsub.s32 %v674, %v676
        %v678 = vrot.slane %v664, %v677
        %v679 = vcombine.high %v655, 0.0
        %v680 = vcombine.high %v662, 0.0
        %v681 = vcombine.high %v671, 0.0
        %v682 = vcombine.high %v678, 0.0
        %v683 = vcombine.low %v655, %v662
        %v685 = vunpack.c.l.s4 1983009808
        %v686 = vunpack.c.0.s8 %v685
        %v687 = vlaneseq
        %v688 = vshrl.u32 %v687, 7
        %v689 = vsub.s32 %v686, %v688
        %v690 = vrot.slane %v683, %v689
        %v691 = vcombine.low %v679, %v680
        %v693 = vunpack.c.l.s4 1983009808
        %v694 = vunpack.c.0.s8 %v693
        %v695 = vlaneseq
        %v696 = vshrl.u32 %v695, 7
        %v697 = vsub.s32 %v694, %v696
        %v698 = vrot.slane %v691, %v697
        %v699 = vcombine.low %v671, %v678
        %v701 = vunpack.c.l.s4 1983009808
        %v702 = vunpack.c.0.s8 %v701
        %v703 = vlaneseq
        %v704 = vshrl.u32 %v703, 7
        %v705 = vsub.s32 %v702, %v704
        %v706 = vrot.slane %v699, %v705
        %v707 = vcombine.low %v681, %v682
        %v709 = vunpack.c.l.s4 1983009808
        %v710 = vunpack.c.0.s8 %v709
        %v711 = vlaneseq
        %v712 = vshrl.u32 %v711, 7
        %v713 = vsub.s32 %v710, %v712
        %v714 = vrot.slane %v707, %v713
        %v715 = vcombine.low %v690, %v698
        %v716 = vcombine.high %v690, %v698
        %v718 = vunpack.c.l.s4 1934713408
        %v719 = vunpack.c.0.s8 %v718
        %v720 = vlaneseq
        %v721 = vshrl.u32 %v720, 7
        %v722 = vsub.s32 %v719, %v721
        %v723 = vrot.slane %v715, %v722
        %v725 = vunpack.c.l.s4 1934713408
        %v726 = vunpack.c.0.s8 %v725
        %v727 = vlaneseq
        %v728 = vshrl.u32 %v727, 7
        %v729 = vsub.s32 %v726, %v728
        %v730 = vrot.slane %v716, %v729
        %v731 = vcombine.low %v706, %v714
        %v732 = vcombine.high %v706, %v714
        %v734 = vunpack.c.l.s4 1934713408
        %v735 = vunpack.c.0.s8 %v734
        %v736 = vlaneseq
        %v737 = vshrl.u32 %v736, 7
        %v738 = vsub.s32 %v735, %v737
        %v739 = vrot.slane %v731, %v738
        %v741 = vunpack.c.l.s4 1934713408
        %v742 = vunpack.c.0.s8 %v741
        %v743 = vlaneseq
        %v744 = vshrl.u32 %v743, 7
        %v745 = vsub.s32 %v742, %v744
        %v746 = vrot.slane %v732, %v745
        %v747 = vcombine.low %v723, %v739
        %v748 = vcombine.high %v723, %v739
        %v749 = vcombine.low %v730, %v746
        %v750 = vcombine.high %v730, %v746
        %v751 = vpack.c.bf16 %v747, %v747
        %v752 = vpack.c.bf16 %v748, %v748
        %v753 = vpack.c.bf16 %v749, %v749
        %v754 = vpack.c.bf16 %v750, %v750
        %755 = vst.msk [vmem:[%s340] sm:$0xf] %vm598, %v751
        %756 = vst.msk [vmem:[%s340 + $0x4] sm:$0xf] %vm598, %v752
        %757 = vst.msk [vmem:[%s340 + $0x8] sm:$0xf] %vm598, %v753
        %758 = vst.msk [vmem:[%s340 + $0xc] sm:$0xf] %vm598, %v754
        %759 = vrot.lane.b32.xlu0 %v443, 64
        %v760 = vpop.permute.xlu0 %759
        %761 = vrot.lane.b32.xlu0 %v450, 64
        %v762 = vpop.permute.xlu0 %761
        %763 = vrot.lane.b32.xlu0 %v453, 64
        %v764 = vpop.permute.xlu0 %763
        %765 = vrot.lane.b32.xlu0 %v456, 64
        %v766 = vpop.permute.xlu0 %765
        %v771 = vcombine.low %v760, %v764
        %v772 = vcombine.high %v760, %v764
        %v774 = vunpack.c.l.s4 1983009808
        %v775 = vunpack.c.0.s8 %v774
        %v776 = vlaneseq
        %v777 = vshrl.u32 %v776, 7
        %v778 = vsub.s32 %v775, %v777
        %v779 = vrot.slane %v771, %v778
        %v781 = vunpack.c.l.s4 1983009808
        %v782 = vunpack.c.0.s8 %v781
        %v783 = vlaneseq
        %v784 = vshrl.u32 %v783, 7
        %v785 = vsub.s32 %v782, %v784
        %v786 = vrot.slane %v772, %v785
        %v787 = vcombine.low %v762, %v766
        %v788 = vcombine.high %v762, %v766
        %v790 = vunpack.c.l.s4 1983009808
        %v791 = vunpack.c.0.s8 %v790
        %v792 = vlaneseq
        %v793 = vshrl.u32 %v792, 7
        %v794 = vsub.s32 %v791, %v793
        %v795 = vrot.slane %v787, %v794
        %v797 = vunpack.c.l.s4 1983009808
        %v798 = vunpack.c.0.s8 %v797
        %v799 = vlaneseq
        %v800 = vshrl.u32 %v799, 7
        %v801 = vsub.s32 %v798, %v800
        %v802 = vrot.slane %v788, %v801
        %v803 = vcombine.low %v779, %v795
        %v804 = vcombine.high %v779, %v795
        %v806 = vunpack.c.l.s4 1934713408
        %v807 = vunpack.c.0.s8 %v806
        %v808 = vlaneseq
        %v809 = vshrl.u32 %v808, 7
        %v810 = vsub.s32 %v807, %v809
        %v811 = vrot.slane %v803, %v810
        %v813 = vunpack.c.l.s4 1934713408
        %v814 = vunpack.c.0.s8 %v813
        %v815 = vlaneseq
        %v816 = vshrl.u32 %v815, 7
        %v817 = vsub.s32 %v814, %v816
        %v818 = vrot.slane %v804, %v817
        %v819 = vcombine.low %v786, %v802
        %v820 = vcombine.high %v786, %v802
        %v822 = vunpack.c.l.s4 1934713408
        %v823 = vunpack.c.0.s8 %v822
        %v824 = vlaneseq
        %v825 = vshrl.u32 %v824, 7
        %v826 = vsub.s32 %v823, %v825
        %v827 = vrot.slane %v819, %v826
        %v829 = vunpack.c.l.s4 1934713408
        %v830 = vunpack.c.0.s8 %v829
        %v831 = vlaneseq
        %v832 = vshrl.u32 %v831, 7
        %v833 = vsub.s32 %v830, %v832
        %v834 = vrot.slane %v820, %v833
        %v835 = vcombine.high %v811, 0.0
        %v836 = vcombine.high %v818, 0.0
        %v837 = vcombine.high %v827, 0.0
        %v838 = vcombine.high %v834, 0.0
        %v839 = vcombine.low %v811, %v818
        %v841 = vunpack.c.l.s4 1983009808
        %v842 = vunpack.c.0.s8 %v841
        %v843 = vlaneseq
        %v844 = vshrl.u32 %v843, 7
        %v845 = vsub.s32 %v842, %v844
        %v846 = vrot.slane %v839, %v845
        %v847 = vcombine.low %v835, %v836
        %v849 = vunpack.c.l.s4 1983009808
        %v850 = vunpack.c.0.s8 %v849
        %v851 = vlaneseq
        %v852 = vshrl.u32 %v851, 7
        %v853 = vsub.s32 %v850, %v852
        %v854 = vrot.slane %v847, %v853
        %v855 = vcombine.low %v827, %v834
        %v857 = vunpack.c.l.s4 1983009808
        %v858 = vunpack.c.0.s8 %v857
        %v859 = vlaneseq
        %v860 = vshrl.u32 %v859, 7
        %v861 = vsub.s32 %v858, %v860
        %v862 = vrot.slane %v855, %v861
        %v863 = vcombine.low %v837, %v838
        %v865 = vunpack.c.l.s4 1983009808
        %v866 = vunpack.c.0.s8 %v865
        %v867 = vlaneseq
        %v868 = vshrl.u32 %v867, 7
        %v869 = vsub.s32 %v866, %v868
        %v870 = vrot.slane %v863, %v869
        %v871 = vcombine.low %v846, %v854
        %v872 = vcombine.high %v846, %v854
        %v874 = vunpack.c.l.s4 1934713408
        %v875 = vunpack.c.0.s8 %v874
        %v876 = vlaneseq
        %v877 = vshrl.u32 %v876, 7
        %v878 = vsub.s32 %v875, %v877
        %v879 = vrot.slane %v871, %v878
        %v881 = vunpack.c.l.s4 1934713408
        %v882 = vunpack.c.0.s8 %v881
        %v883 = vlaneseq
        %v884 = vshrl.u32 %v883, 7
        %v885 = vsub.s32 %v882, %v884
        %v886 = vrot.slane %v872, %v885
        %v887 = vcombine.low %v862, %v870
        %v888 = vcombine.high %v862, %v870
        %v890 = vunpack.c.l.s4 1934713408
        %v891 = vunpack.c.0.s8 %v890
        %v892 = vlaneseq
        %v893 = vshrl.u32 %v892, 7
        %v894 = vsub.s32 %v891, %v893
        %v895 = vrot.slane %v887, %v894
        %v897 = vunpack.c.l.s4 1934713408
        %v898 = vunpack.c.0.s8 %v897
        %v899 = vlaneseq
        %v900 = vshrl.u32 %v899, 7
        %v901 = vsub.s32 %v898, %v900
        %v902 = vrot.slane %v888, %v901
        %v903 = vcombine.low %v879, %v895
        %v904 = vcombine.high %v879, %v895
        %v905 = vcombine.low %v886, %v902
        %v906 = vcombine.high %v886, %v902
        %v907 = vpack.c.bf16 %v903, %v903
        %v908 = vpack.c.bf16 %v904, %v904
        %v909 = vpack.c.bf16 %v905, %v905
        %v910 = vpack.c.bf16 %v906, %v906
        %911 = vst.msk [vmem:[%s347] sm:$0xf] %vm598, %v907
        %912 = vst.msk [vmem:[%s347 + $0x4] sm:$0xf] %vm598, %v908
        %913 = vst.msk [vmem:[%s347 + $0x8] sm:$0xf] %vm598, %v909
        %914 = vst.msk [vmem:[%s347 + $0xc] sm:$0xf] %vm598, %v910
        %s915 = sand.u32 %s163, 1
        %s916 = scalar_lea.sflag [#allocation4], %s915
        %s917 = sand.u32 %s163, 1
        %s918 = smul.addr %s917, 16
        %s919 = scalar_lea.vmem [#allocation7], %s918
        %s920 = sand.u32 %s29, 1
        %s921 = scalar_lea.sflag [#allocation9], %s920
        %s922 = sand.u32 %s191, 1
        %s923 = smul.addr %s922, 16
        %s924 = scalar_lea.vmem [#allocation8], %s923
        %s925 = sand.u32 %s29, 1
        %s926 = scalar_lea.sflag [#allocation9], %s925
        %s927 = sand.u32 %s219, 1
        %s928 = smul.addr %s927, 16
        %s929 = scalar_lea.vmem [#allocation10], %s928
        // Predicated region
        $region49: #{tpu_custom_call.1} parent=39 // pred_check
          %p930 = pneg %p173
        $region50: #{tpu_custom_call.1} parent=39 // pred_check_branch
          %932 = sbr.rel (%p930) target = $region52
        $region51: #{tpu_custom_call.1} parent=39 // pred_region
          %s934 = ssub.s32 256, 256
          %935 = vsyncadd %s916, %s934
          %s936 = smul.addr %s33, 4
          %s937 = sadd.s32 %s34, %s936
          %s938 = smul.addr %s937, 64
          %s939 = scalar_lea.hbm %s5, %s938
          %s940 = sshll.u32 %s919, 4
          %s941 = int_to_ptr.vmem [resolvable:$true] %s940
          %946 = dma.vmem_to_hbm [thread:$0]  %s941, 256, %s939, %s916, 64, 64, 4
        $region52: #{tpu_custom_call.1} parent=39 // pred_fallthru
          _
        // Predicated region
        $region53: #{tpu_custom_call.1} parent=39 // pred_check
          %p947 = pneg %p201
        $region54: #{tpu_custom_call.1} parent=39 // pred_check_branch
          %949 = sbr.rel (%p947) target = $region56
        $region55: #{tpu_custom_call.1} parent=39 // pred_region
          %s951 = ssub.s32 256, 256
          %952 = vsyncadd %s921, %s951
          %s953 = smul.addr %s33, 4
          %s954 = sadd.s32 %s34, %s953
          %s955 = smul.addr %s954, 64
          %s956 = scalar_lea.hbm %s6, %s955
          %s957 = sshll.u32 %s924, 4
          %s958 = int_to_ptr.vmem [resolvable:$true] %s957
          %963 = dma.vmem_to_hbm [thread:$0]  %s958, 256, %s956, %s921, 64, 64, 4
        $region56: #{tpu_custom_call.1} parent=39 // pred_fallthru
          _
        // Predicated region
        $region57: #{tpu_custom_call.1} parent=39 // pred_check
          %p964 = pneg %p229
        $region58: #{tpu_custom_call.1} parent=39 // pred_check_branch
          %966 = sbr.rel (%p964) target = $region60
        $region59: #{tpu_custom_call.1} parent=39 // pred_region
          %s968 = ssub.s32 256, 256
          %969 = vsyncadd %s926, %s968
          %s970 = smul.addr %s33, 4
          %s971 = sadd.s32 %s34, %s970
          %s972 = smul.addr %s971, 64
          %s973 = scalar_lea.hbm %s7, %s972
          %s974 = sshll.u32 %s929, 4
          %s975 = int_to_ptr.vmem [resolvable:$true] %s974
          %980 = dma.vmem_to_hbm [thread:$0]  %s975, 256, %s973, %s926, 64, 64, 4
        $region60: #{tpu_custom_call.1} parent=39 // pred_fallthru
          _
      $region40: #{tpu_custom_call.1} parent=5 // pred_fallthru
        _
      %p981 = scmp.le.s32.totalorder 2, %s24
      // Predicated region
      $region61: #{tpu_custom_call.1} parent=5 // pred_check
        %p982 = pneg %p981
      $region62: #{tpu_custom_call.1} parent=5 // pred_check_branch
        %984 = sbr.rel (%p982) target = $region64
      $region63: #{tpu_custom_call.1} parent=5 // pred_region
        %s985 = ssub.s32 %s24, 2
        // Predicated region
        $region65: #{tpu_custom_call.1} parent=63 // pred_check
          %p986 = pneg %p179
        $region66: #{tpu_custom_call.1} parent=63 // pred_check_branch
          %988 = sbr.rel (%p986) target = $region68
        $region67: #{tpu_custom_call.1} parent=63 // pred_region
          %s989 = sand.u32 %s164, 1
          %s990 = scalar_lea.sflag [#allocation4], %s989
          %s991 = sand.u32 %s164, 1
          %s992 = smul.addr %s991, 16
          %s993 = scalar_lea.vmem [#allocation7], %s992
          %994 = dma.done %s990, 256
        $region68: #{tpu_custom_call.1} parent=63 // pred_fallthru
          _
        // Predicated region
        $region69: #{tpu_custom_call.1} parent=63 // pred_check
          %p995 = pneg %p207
        $region70: #{tpu_custom_call.1} parent=63 // pred_check_branch
          %997 = sbr.rel (%p995) target = $region72
        $region71: #{tpu_custom_call.1} parent=63 // pred_region
          %s998 = sand.u32 %s30, 1
          %s999 = scalar_lea.sflag [#allocation9], %s998
          %s1000 = sand.u32 %s192, 1
          %s1001 = smul.addr %s1000, 16
          %s1002 = scalar_lea.vmem [#allocation8], %s1001
          %1003 = dma.done %s999, 256
        $region72: #{tpu_custom_call.1} parent=63 // pred_fallthru
          _
        // Predicated region
        $region73: #{tpu_custom_call.1} parent=63 // pred_check
          %p1004 = pneg %p235
        $region74: #{tpu_custom_call.1} parent=63 // pred_check_branch
          %1006 = sbr.rel (%p1004) target = $region76
        $region75: #{tpu_custom_call.1} parent=63 // pred_region
          %s1007 = sand.u32 %s30, 1
          %s1008 = scalar_lea.sflag [#allocation9], %s1007
          %s1009 = sand.u32 %s220, 1
          %s1010 = smul.addr %s1009, 16
          %s1011 = scalar_lea.vmem [#allocation10], %s1010
          %1012 = dma.done %s1008, 256
        $region76: #{tpu_custom_call.1} parent=63 // pred_fallthru
          _
      $region64: #{tpu_custom_call.1} parent=5 // pred_fallthru
        _
    $region6: #{tpu_custom_call.1} parent=1 // loop_footer
      %s28 = sadd.s32 1, %s24
    $region7: #{tpu_custom_call.1} parent=1 // loop_footer_branch
      %23 = sbr.rel target = $region3
    $region8: #{tpu_custom_call.1} parent=1 // loop_exit
      _
    %1013 = vsyncpa [#allocation3], 1
    %s1014 = scalar_lea.sflag [#allocation3], 1
    %1015 = vsyncpa %s1014, 1
    %1016 = vsyncpa [#allocation6], 1
    %1017 = vsyncpa [#allocation4], 1
    %s1018 = scalar_lea.sflag [#allocation4], 1
    %1019 = vsyncpa %s1018, 1
    %1020 = vsyncpa [#allocation9], 1
    %s1021 = scalar_lea.sflag [#allocation9], 1
    %1022 = vsyncpa %s1021, 1

</llo_original>
